<compile_context>
chip_gen: v7x
topology: tpu7x:2x2x1
jax: 0.10.0
libtpu: 0.0.40
codegen_flags: <defaults>
</compile_context>

<pallas_src>
import functools

import numpy as np
import jax
import jax.numpy as jnp
from jax.experimental import pallas as pl
from jax.experimental.pallas import tpu as pltpu


LANES = 128          # lane-dense padded class dimension
NEG_LOGIT = -1e9     # padded-column logit (exp underflows to 0)


# ----------------------------------------------------------------------------
# Glue: circuit construction (deterministic numpy, runs once per parameter set)
# ----------------------------------------------------------------------------
def _rot_matrix(phi, theta, omega):
    """qml.Rot(phi, theta, omega) = RZ(omega) RY(theta) RZ(phi)."""
    c, s = np.cos(theta / 2.0), np.sin(theta / 2.0)
    return np.array(
        [
            [np.exp(-0.5j * (phi + omega)) * c, -np.exp(0.5j * (phi - omega)) * s],
            [np.exp(-0.5j * (phi - omega)) * s, np.exp(0.5j * (phi + omega)) * c],
        ],
        dtype=np.complex128,
    )


def _single_qubit_full(gate, wire, n):
    return np.kron(np.kron(np.eye(2 ** wire), gate), np.eye(2 ** (n - wire - 1)))


def _cnot_full(control, target, n):
    dim = 2 ** n
    m = np.zeros((dim, dim), dtype=np.complex128)
    for k in range(dim):
        cbit = (k >> (n - 1 - control)) & 1
        kp = k ^ (1 << (n - 1 - target)) if cbit else k
        m[kp, k] = 1.0
    return m


def strongly_entangling_unitary(weights, n):
    """Full unitary of qml.StronglyEntanglingLayers(weights, wires=range(n))."""
    num_layers = weights.shape[0]
    dim = 2 ** n
    u = np.eye(dim, dtype=np.complex128)
    for l in range(num_layers):
        layer_u = np.eye(dim, dtype=np.complex128)
        for w in range(n):
            g = _rot_matrix(*weights[l, w])
            layer_u = _single_qubit_full(g, w, n) @ layer_u
        if n > 1:
            r = (l % (n - 1)) + 1
            for w in range(n):
                layer_u = _cnot_full(w, (w + r) % n, n) @ layer_u
        u = layer_u @ u
    return u


def angle_embedding_states(x):
    """Reference-only: AngleEmbedding (rotation='X') product states (complex)."""
    b, n = x.shape
    states = np.zeros((b, 2 ** n), dtype=np.complex128)
    for i in range(b):
        psi = np.array([1.0 + 0.0j])
        for xi in x[i]:
            v = np.array([np.cos(xi / 2.0), -1j * np.sin(xi / 2.0)])
            psi = np.kron(psi, v)
        states[i] = psi
    return states


# ----------------------------------------------------------------------------
# Host-side constant packing (cached across calls)
# ----------------------------------------------------------------------------
_CONST_CACHE = {}


def _build_constants(weights, bias, scale, classes):
    weights = np.asarray(weights, np.float64)
    bias = np.asarray(bias, np.float64)
    scale = np.asarray(scale, np.float64)
    key = (weights.tobytes(), bias.tobytes(), scale.tobytes(), tuple(classes),
           weights.shape)
    hit = _CONST_CACHE.get(key)
    if hit is not None:
        return hit

    n = weights.shape[1]
    dim = 2 ** n
    c = len(classes)
    assert c <= LANES, "class count exceeds lane padding"

    u = strongly_entangling_unitary(weights, n)          # (D, D) complex128
    ut = u.T

    # Fold the embedding phase (-i)^popcount(k) into the unitary: V = diag(phase) U^T
    k = np.arange(dim)
    pop = ((k[:, None] >> np.arange(n)[None, :]) & 1).sum(axis=1) % 4
    phase = np.array([1 + 0j, -1j, -1 + 0j, 1j], dtype=np.complex128)[pop]
    v = phase[:, None] * ut                              # (D, D) complex
    w_packed = np.concatenate([v.real, v.imag], axis=1)  # (D, 2D) real

    # PauliZ sign matrix with bias & scale folded in (sum_k probs_k == 1),
    # padded to 128 lanes; padded columns produce a huge negative logit.
    zsign = np.stack(
        [1.0 - 2.0 * ((k >> (n - 1 - i)) & 1) for i in range(c)], axis=1
    )                                                    # (D, C)
    zs = np.full((dim, LANES), NEG_LOGIT, np.float64)
    zs[:, :c] = (zsign + bias[None, :]) * scale[None, :]

    out = (jnp.asarray(w_packed, jnp.float32),
           jnp.asarray(zs, jnp.float32),
           n, dim, c)
    _CONST_CACHE[key] = out
    return out


# ----------------------------------------------------------------------------
# Pallas kernel
# ----------------------------------------------------------------------------
def _vqc_kernel(x_ref, w_ref, zs_ref, out_ref, *, n, dim):
    x = x_ref[...]                                   # (TB, n) angles
    half = x * 0.5
    cos_h = jnp.cos(half)                            # (TB, n)
    sin_h = jnp.sin(half)

    # Embedding magnitudes m[b, k] = prod_i (cos if bit_i(k)==0 else sin)
    k_idx = jax.lax.broadcasted_iota(jnp.int32, (1, dim), 1)   # (1, D)
    m = None
    for i in range(n):
        bit = (k_idx >> (n - 1 - i)) & 1
        f = jnp.where(bit == 1, sin_h[:, i:i + 1], cos_h[:, i:i + 1])  # (TB, D)
        m = f if m is None else m * f

    # One packed real matmul: (TB, D) @ (D, 2D) -> [psi_re | psi_im]
    psi = jnp.dot(m, w_ref[...], preferred_element_type=jnp.float32)
    psi_re = psi[:, :dim]
    psi_im = psi[:, dim:]
    probs = psi_re * psi_re + psi_im * psi_im        # (TB, D)

    # PauliZ expectations, bias & scale already folded into zs (lane-dense N=128)
    logits = jnp.dot(probs, zs_ref[...], preferred_element_type=jnp.float32)

    # Softmax (padded lanes carry NEG_LOGIT -> exp == 0)
    mx = jnp.max(logits, axis=-1, keepdims=True)
    e = jnp.exp(logits - mx)
    denom = jnp.sum(e, axis=-1, keepdims=True)
    r = pl.reciprocal(denom, approx=True)
    r = r * (2.0 - denom * r)                        # one Newton step -> f32 accuracy
    out_ref[...] = e * r


def vqc_forward(x, weights, bias, scale, classes, shall_data_reupload=False,
                block_b=256):
    """Equivalent of VQC.forward for a batch x of shape (B, num_qubits)."""
    if shall_data_reupload:
        # TODO(synk): data re-upload interleaves the data-dependent embedding with
        # each entangling layer; only the shall_data_reupload=False path is kernelized.
        raise NotImplementedError("data re-upload path not implemented")

    w_packed, zs, n, dim, c = _build_constants(weights, bias, scale, classes)

    x = jnp.asarray(x, jnp.float32)
    b = x.shape[0]
    assert x.shape == (b, n)

    # Batch tile: multiple of 8 sublanes; grid over batch (parallel across cores).
    if b > block_b:
        tb = block_b
    else:
        tb = max(8, -(-b // 8) * 8)
    pad_b = -(-b // tb) * tb
    if pad_b != b:
        x = jnp.pad(x, ((0, pad_b - b), (0, 0)))     # padded rows give valid states

    out = pl.pallas_call(
        functools.partial(_vqc_kernel, n=n, dim=dim),
        out_shape=jax.ShapeDtypeStruct((pad_b, LANES), jnp.float32),
        grid_spec=pltpu.PrefetchScalarGridSpec(
            num_scalar_prefetch=0,
            grid=(pad_b // tb,),
            in_specs=[
                pl.BlockSpec((tb, n), lambda i: (i, 0)),          # x tile
                pl.BlockSpec((dim, 2 * dim), lambda i: (0, 0)),   # packed [Vr|Vi], resident
                pl.BlockSpec((dim, LANES), lambda i: (0, 0)),     # folded zsign, resident
            ],
            out_specs=pl.BlockSpec((tb, LANES), lambda i: (i, 0)),
        ),
        compiler_params=pltpu.CompilerParams(
            dimension_semantics=("parallel",)),
    )(x, w_packed, zs)

    return out[:b, :c]


# ----------------------------------------------------------------------------
# Pure numpy reference (independent path: explicit kron states, 4-real-matmul)
# ----------------------------------------------------------------------------
def vqc_reference(x, weights, bias, scale, classes):
    n = np.asarray(weights).shape[1]
    c = len(classes)
    u = strongly_entangling_unitary(np.asarray(weights, np.float64), n)
    psi0 = angle_embedding_states(np.asarray(x, np.float64))
    psi = psi0 @ u.T
    probs = np.abs(psi) ** 2
    k = np.arange(2 ** n)
    zsign = np.stack(
        [1.0 - 2.0 * ((k >> (n - 1 - i)) & 1) for i in range(c)], axis=1
    )
    z = probs @ zsign
    logits = (z + np.asarray(bias)) * np.asarray(scale)
    e = np.exp(logits - logits.max(axis=-1, keepdims=True))
    return e / e.sum(axis=-1, keepdims=True)


if __name__ == "__main__":
    # Module hyperparameters (small, consistent with VQC.__init__)
    classes = [0, 1, 2, 3]
    num_qubits = 4
    num_layers = 3
    shall_data_reupload = False
    uniform_range = 1.0
    batch = 8

    # Deterministic parameter init (mirrors uniform(-r, r) weights, zeros bias,
    # ones output_scale_factor).
    wrng = np.random.default_rng(0)
    weights = wrng.uniform(
        -uniform_range, uniform_range, size=(num_layers, num_qubits, 3)
    ).astype(np.float32)
    bias = np.zeros(len(classes), np.float32)
    output_scale_factor = np.ones(len(classes), np.float32)

    # Example input: batch of angle features, one per qubit.
    key = jax.random.PRNGKey(0)
    x = jax.random.uniform(
        key, (batch, num_qubits), jnp.float32, minval=-np.pi, maxval=np.pi
    )

    out = vqc_forward(x, weights, bias, output_scale_factor, classes,
                      shall_data_reupload=shall_data_reupload)
    out = jax.block_until_ready(out)

    ref = vqc_reference(np.asarray(x), weights, bias, output_scale_factor, classes)
    np.testing.assert_allclose(np.asarray(out), ref, rtol=1e-4, atol=1e-4)
    assert out.shape == (batch, len(classes))
    np.testing.assert_allclose(np.asarray(out).sum(axis=-1), 1.0, atol=1e-5)

    # Second call hits the constant cache (same parameters).
    out2 = jax.block_until_ready(
        vqc_forward(x, weights, bias, output_scale_factor, classes))
    np.testing.assert_allclose(np.asarray(out2), ref, rtol=1e-4, atol=1e-4)

    print("KERNEL_OK")
</pallas_src>

<mosaic_0001>
module attributes {stable_mosaic.version = 11 : i64} {
  func.func @_vqc_kernel(%arg0: i32, %arg1: memref<8x4xf32, #tpu.memory_space<vmem>>, %arg2: memref<16x32xf32, #tpu.memory_space<vmem>>, %arg3: memref<16x128xf32, #tpu.memory_space<vmem>>, %arg4: memref<8x128xf32, #tpu.memory_space<vmem>>) attributes {dimension_semantics = [#tpu.dimension_semantics<parallel>], iteration_bounds = array<i64: 1>, scalar_prefetch = 0 : i64, scratch_operands = 0 : i64, tpu.core_type = #tpu.core_type<tc>, window_params = [{transform_indices = @transform_0, window_bounds = array<i64: 8, 4>}, {pipeline_mode = #tpu.pipeline_mode<synchronous>, transform_indices = @transform_1, window_bounds = array<i64: 16, 32>}, {pipeline_mode = #tpu.pipeline_mode<synchronous>, transform_indices = @transform_2, window_bounds = array<i64: 16, 128>}, {transform_indices = @transform_3, window_bounds = array<i64: 8, 128>}]} {
    %c0 = arith.constant 0 : index
    %c0_0 = arith.constant 0 : index
    %0 = vector.load %arg1[%c0, %c0_0] : memref<8x4xf32, #tpu.memory_space<vmem>>, vector<8x4xf32>
    %cst = arith.constant 5.000000e-01 : f32
    %1 = vector.broadcast %cst : f32 to vector<8x4xf32>
    %2 = arith.mulf %0, %1 : vector<8x4xf32>
    %3 = math.cos %2 : vector<8x4xf32>
    %4 = math.sin %2 : vector<8x4xf32>
    %5 = tpu.iota {dimensions = array<i32: 1>} : vector<1x16xi32>
    %c3_i32 = arith.constant 3 : i32
    %6 = vector.broadcast %c3_i32 : i32 to vector<1x16xi32>
    %7 = arith.shrsi %5, %6 : vector<1x16xi32>
    %c1_i32 = arith.constant 1 : i32
    %8 = vector.broadcast %c1_i32 : i32 to vector<1x16xi32>
    %9 = arith.andi %7, %8 : vector<1x16xi32>
    %c1_i32_1 = arith.constant 1 : i32
    %10 = vector.broadcast %c1_i32_1 : i32 to vector<1x16xi32>
    %11 = arith.cmpi eq, %9, %10 : vector<1x16xi32>
    %12 = vector.extract_strided_slice %4 {offsets = [0, 0], sizes = [8, 1], strides = [1, 1]} : vector<8x4xf32> to vector<8x1xf32>
    %13 = vector.extract_strided_slice %3 {offsets = [0, 0], sizes = [8, 1], strides = [1, 1]} : vector<8x4xf32> to vector<8x1xf32>
    %14 = vector.shape_cast %11 : vector<1x16xi1> to vector<1x16xi1>
    %15 = vector.broadcast %14 : vector<1x16xi1> to vector<8x16xi1>
    %16 = vector.shape_cast %12 : vector<8x1xf32> to vector<8x1xf32>
    %17 = vector.broadcast %16 : vector<8x1xf32> to vector<8x16xf32>
    %18 = vector.shape_cast %13 : vector<8x1xf32> to vector<8x1xf32>
    %19 = vector.broadcast %18 : vector<8x1xf32> to vector<8x16xf32>
    %20 = arith.select %15, %17, %19 : vector<8x16xi1>, vector<8x16xf32>
    %c2_i32 = arith.constant 2 : i32
    %21 = vector.broadcast %c2_i32 : i32 to vector<1x16xi32>
    %22 = arith.shrsi %5, %21 : vector<1x16xi32>
    %c1_i32_2 = arith.constant 1 : i32
    %23 = vector.broadcast %c1_i32_2 : i32 to vector<1x16xi32>
    %24 = arith.andi %22, %23 : vector<1x16xi32>
    %c1_i32_3 = arith.constant 1 : i32
    %25 = vector.broadcast %c1_i32_3 : i32 to vector<1x16xi32>
    %26 = arith.cmpi eq, %24, %25 : vector<1x16xi32>
    %27 = vector.extract_strided_slice %4 {offsets = [0, 1], sizes = [8, 1], strides = [1, 1]} : vector<8x4xf32> to vector<8x1xf32>
    %28 = vector.extract_strided_slice %3 {offsets = [0, 1], sizes = [8, 1], strides = [1, 1]} : vector<8x4xf32> to vector<8x1xf32>
    %29 = vector.shape_cast %26 : vector<1x16xi1> to vector<1x16xi1>
    %30 = vector.broadcast %29 : vector<1x16xi1> to vector<8x16xi1>
    %31 = vector.shape_cast %27 : vector<8x1xf32> to vector<8x1xf32>
    %32 = vector.broadcast %31 : vector<8x1xf32> to vector<8x16xf32>
    %33 = vector.shape_cast %28 : vector<8x1xf32> to vector<8x1xf32>
    %34 = vector.broadcast %33 : vector<8x1xf32> to vector<8x16xf32>
    %35 = arith.select %30, %32, %34 : vector<8x16xi1>, vector<8x16xf32>
    %36 = arith.mulf %20, %35 : vector<8x16xf32>
    %c1_i32_4 = arith.constant 1 : i32
    %37 = vector.broadcast %c1_i32_4 : i32 to vector<1x16xi32>
    %38 = arith.shrsi %5, %37 : vector<1x16xi32>
    %c1_i32_5 = arith.constant 1 : i32
    %39 = vector.broadcast %c1_i32_5 : i32 to vector<1x16xi32>
    %40 = arith.andi %38, %39 : vector<1x16xi32>
    %c1_i32_6 = arith.constant 1 : i32
    %41 = vector.broadcast %c1_i32_6 : i32 to vector<1x16xi32>
    %42 = arith.cmpi eq, %40, %41 : vector<1x16xi32>
    %43 = vector.extract_strided_slice %4 {offsets = [0, 2], sizes = [8, 1], strides = [1, 1]} : vector<8x4xf32> to vector<8x1xf32>
    %44 = vector.extract_strided_slice %3 {offsets = [0, 2], sizes = [8, 1], strides = [1, 1]} : vector<8x4xf32> to vector<8x1xf32>
    %45 = vector.shape_cast %42 : vector<1x16xi1> to vector<1x16xi1>
    %46 = vector.broadcast %45 : vector<1x16xi1> to vector<8x16xi1>
    %47 = vector.shape_cast %43 : vector<8x1xf32> to vector<8x1xf32>
    %48 = vector.broadcast %47 : vector<8x1xf32> to vector<8x16xf32>
    %49 = vector.shape_cast %44 : vector<8x1xf32> to vector<8x1xf32>
    %50 = vector.broadcast %49 : vector<8x1xf32> to vector<8x16xf32>
    %51 = arith.select %46, %48, %50 : vector<8x16xi1>, vector<8x16xf32>
    %52 = arith.mulf %36, %51 : vector<8x16xf32>
    %c0_i32 = arith.constant 0 : i32
    %53 = vector.broadcast %c0_i32 : i32 to vector<1x16xi32>
    %54 = arith.shrsi %5, %53 : vector<1x16xi32>
    %c1_i32_7 = arith.constant 1 : i32
    %55 = vector.broadcast %c1_i32_7 : i32 to vector<1x16xi32>
    %56 = arith.andi %54, %55 : vector<1x16xi32>
    %c1_i32_8 = arith.constant 1 : i32
    %57 = vector.broadcast %c1_i32_8 : i32 to vector<1x16xi32>
    %58 = arith.cmpi eq, %56, %57 : vector<1x16xi32>
    %59 = vector.extract_strided_slice %4 {offsets = [0, 3], sizes = [8, 1], strides = [1, 1]} : vector<8x4xf32> to vector<8x1xf32>
    %60 = vector.extract_strided_slice %3 {offsets = [0, 3], sizes = [8, 1], strides = [1, 1]} : vector<8x4xf32> to vector<8x1xf32>
    %61 = vector.shape_cast %58 : vector<1x16xi1> to vector<1x16xi1>
    %62 = vector.broadcast %61 : vector<1x16xi1> to vector<8x16xi1>
    %63 = vector.shape_cast %59 : vector<8x1xf32> to vector<8x1xf32>
    %64 = vector.broadcast %63 : vector<8x1xf32> to vector<8x16xf32>
    %65 = vector.shape_cast %60 : vector<8x1xf32> to vector<8x1xf32>
    %66 = vector.broadcast %65 : vector<8x1xf32> to vector<8x16xf32>
    %67 = arith.select %62, %64, %66 : vector<8x16xi1>, vector<8x16xf32>
    %68 = arith.mulf %52, %67 : vector<8x16xf32>
    %c0_9 = arith.constant 0 : index
    %c0_10 = arith.constant 0 : index
    %69 = vector.load %arg2[%c0_9, %c0_10] : memref<16x32xf32, #tpu.memory_space<vmem>>, vector<16x32xf32>
    %cst_11 = arith.constant dense<0.000000e+00> : vector<8x32xf32>
    %70 = tpu.matmul %68, %69, %cst_11 {dimension_numbers = #tpu.dot_dimension_numbers<[1], [0], [0], [1], [0, 0, 1, 1], [], []>} : vector<8x16xf32>, vector<16x32xf32>, vector<8x32xf32> -> vector<8x32xf32>
    %71 = vector.extract_strided_slice %70 {offsets = [0, 0], sizes = [8, 16], strides = [1, 1]} : vector<8x32xf32> to vector<8x16xf32>
    %72 = vector.extract_strided_slice %70 {offsets = [0, 16], sizes = [8, 16], strides = [1, 1]} : vector<8x32xf32> to vector<8x16xf32>
    %73 = arith.mulf %71, %71 : vector<8x16xf32>
    %74 = arith.mulf %72, %72 : vector<8x16xf32>
    %75 = arith.addf %73, %74 : vector<8x16xf32>
    %c0_12 = arith.constant 0 : index
    %c0_13 = arith.constant 0 : index
    %76 = vector.load %arg3[%c0_12, %c0_13] : memref<16x128xf32, #tpu.memory_space<vmem>>, vector<16x128xf32>
    %cst_14 = arith.constant dense<0.000000e+00> : vector<8x128xf32>
    %77 = tpu.matmul %75, %76, %cst_14 {dimension_numbers = #tpu.dot_dimension_numbers<[1], [0], [0], [1], [0, 0, 1, 1], [], []>} : vector<8x16xf32>, vector<16x128xf32>, vector<8x128xf32> -> vector<8x128xf32>
    %cst_15 = arith.constant dense<0xFF800000> : vector<8xf32>
    %78 = vector.multi_reduction <maximumf>, %77, %cst_15 [1] : vector<8x128xf32> to vector<8xf32>
    %79 = vector.shape_cast %78 : vector<8xf32> to vector<8x1xf32>
    %80 = vector.broadcast %79 : vector<8x1xf32> to vector<8x128xf32>
    %81 = arith.subf %77, %80 : vector<8x128xf32>
    %82 = math.exp %81 : vector<8x128xf32>
    %cst_16 = arith.constant dense<0.000000e+00> : vector<8xf32>
    %83 = vector.multi_reduction <add>, %82, %cst_16 [1] : vector<8x128xf32> to vector<8xf32>
    %84 = vector.shape_cast %83 : vector<8xf32> to vector<8x1xf32>
    %85 = tpu.reciprocal %84 {approx = true} : vector<8x1xf32> -> vector<8x1xf32>
    %86 = arith.mulf %84, %85 : vector<8x1xf32>
    %cst_17 = arith.constant 2.000000e+00 : f32
    %87 = vector.broadcast %cst_17 : f32 to vector<8x1xf32>
    %88 = arith.subf %87, %86 : vector<8x1xf32>
    %89 = arith.mulf %85, %88 : vector<8x1xf32>
    %90 = vector.broadcast %89 : vector<8x1xf32> to vector<8x128xf32>
    %91 = arith.mulf %82, %90 : vector<8x128xf32>
    %c0_18 = arith.constant 0 : index
    %c0_19 = arith.constant 0 : index
    %92 = vector.load %arg4[%c0_18, %c0_19] : memref<8x128xf32, #tpu.memory_space<vmem>>, vector<8x128xf32>
    tpu.vector_store %arg4[%c0_18, %c0_19], %91 {strides = array<i32>} : memref<8x128xf32, #tpu.memory_space<vmem>>, vector<8x128xf32>,
    return
  }
  func.func @transform_0(%arg0: i32) -> (i32, i32) {
    %c0_i32 = arith.constant 0 : i32
    %c0_i32_0 = arith.constant 0 : i32
    return %arg0, %c0_i32 : i32, i32
  }
  func.func @transform_1(%arg0: i32) -> (i32, i32) {
    %c0_i32 = arith.constant 0 : i32
    %c0_i32_0 = arith.constant 0 : i32
    %c0_i32_1 = arith.constant 0 : i32
    return %c0_i32, %c0_i32_0 : i32, i32
  }
  func.func @transform_2(%arg0: i32) -> (i32, i32) {
    %c0_i32 = arith.constant 0 : i32
    %c0_i32_0 = arith.constant 0 : i32
    %c0_i32_1 = arith.constant 0 : i32
    return %c0_i32, %c0_i32_0 : i32, i32
  }
  func.func @transform_3(%arg0: i32) -> (i32, i32) {
    %c0_i32 = arith.constant 0 : i32
    %c0_i32_0 = arith.constant 0 : i32
    return %arg0, %c0_i32 : i32, i32
  }
}

</mosaic_0001>

<llo_original>
// kernel: tpu_custom_call.1
$region0: #{tpu_custom_call.1}
  #allocation0 [shape = 'u32[]', space=smem, size = 0x4, offset = 0x4, fixed_abs, tag = 'smem constant byte address 0x4 - core index']
  #allocation1 [shape = 'u32[144,128]{1,0:T(1,128)}', space=vmem, size = 0x12000, scoped, tag = 'internal scratch']
  %s0 = inlined_call_operand.vmem [shape: f32[8,4], index: 0, kind: input, shape index: {}]
  %s1 = inlined_call_operand.hbm [shape: f32[16,32], index: 1, kind: input, shape index: {}]
  %s2 = inlined_call_operand.vmem [shape: f32[16,128], index: 2, kind: input, shape index: {}]
  %s3 = inlined_call_operand.hbm [shape: f32[8,128], index: 3, kind: output, shape index: {}]
  %s4 = sld [smem:[#allocation0]]
  $region26: #{tpu_custom_call.1} parent=0
    _
  %s6 = ssub.s32 1, %s4
  %s7 = scalar_select 0, %s6, %s4
  $region1: #{tpu_custom_call.1} parent=0
    #allocation2 [shape = 'u8[8192]{0}', space=vmem, size = 0x2000, scoped, tag = 'input window, operand 1, single buffered']
    #allocation3 [shape = 's32[1]{0}', space=sflag, size = 0x4, scoped, tag = 'scoped memory for tpu_custom_call.1']
    #allocation4 [shape = 's32[1]{0}', space=sflag, size = 0x4, scoped, tag = 'scoped memory for tpu_custom_call.1']
    #allocation5 [shape = 'u8[4096]{0}', space=vmem, size = 0x1000, scoped, tag = 'output window, operand 0, single buffered']
    %8 = vsyncpa [#allocation3], 0
    %9 = vsyncpa [#allocation4], 0
    // Predicated region
    $region2: #{tpu_custom_call.1} parent=1 // pred_check
      _
    $region3: #{tpu_custom_call.1} parent=1 // pred_check_branch
      %11 = sbr.rel (0) target = $region5
    $region4: #{tpu_custom_call.1} parent=1 // pred_region
      _
    $region5: #{tpu_custom_call.1} parent=1 // pred_fallthru
      _
    // Predicated region
    $region6: #{tpu_custom_call.1} parent=1 // pred_check
      _
    $region7: #{tpu_custom_call.1} parent=1 // pred_check_branch
      %13 = sbr.rel (0) target = $region9
    $region8: #{tpu_custom_call.1} parent=1 // pred_region
      %s15 = ssub.s32 256, 256
      %16 = vsyncadd [#allocation3], %s15
      %s17 = sshll.u32 [#allocation2], 4
      %s18 = int_to_ptr.vmem [resolvable:$true] %s17
      %23 = dma.hbm_to_vmem [thread:$0]  %s1, 256, %s18, [#allocation3], 128, 128, 8
    $region9: #{tpu_custom_call.1} parent=1 // pred_fallthru
      _
    // Predicated region
    $region10: #{tpu_custom_call.1} parent=1 // pred_check
      _
    $region11: #{tpu_custom_call.1} parent=1 // pred_check_branch
      %25 = sbr.rel (0) target = $region13
    $region12: #{tpu_custom_call.1} parent=1 // pred_region
      _
    $region13: #{tpu_custom_call.1} parent=1 // pred_fallthru
      _
    // Predicated region
    $region14: #{tpu_custom_call.1} parent=1 // pred_check
      _
    $region15: #{tpu_custom_call.1} parent=1 // pred_check_branch
      %27 = sbr.rel (0) target = $region17
    $region16: #{tpu_custom_call.1} parent=1 // pred_region
      %28 = dma.done [#allocation3], 256
    $region17: #{tpu_custom_call.1} parent=1 // pred_fallthru
      _
    %v29 = vld [vmem:[%s0] sm:$0xff]
    %v30 = vmul.f32 %v29, 0.5
    %v31 = vand.u32 2147483647, %v30
    %vm32 = vcmp.le.f32.partialorder %v31, 0.7853982
    %vm33 = vcmp.lt.s32.totalorder %v30, 0
    %v34 = vand.u32 %v30, 2139095040
    %v35 = vshrl.u32 %v34, 23
    %v36 = vsub.s32 %v35, 127
    %v37 = vand.u32 2147483647, %v30
    %v38 = vand.u32 %v37, 8388607
    %v39 = vor.u32 %v38, 8388608
    %v40 = vsub.s32 0, %v39
    %v41 = vadd.s32 %v36, 1
    %vm42 = vcmp.gt.s32.totalorder %v41, 0
    %v43 = vsel %vm42, %v41, 0
    %v44 = vshrl.u32 %v43, 5
    %v45 = vand.u32 %v43, 31
    %v46 = vsub.s32 32, %v45
    %v47 = vshrl.u32 683565275, %v46
    %v48 = vshll.u32 683565275, %v45
    %v49 = vshrl.u32 2475754826, %v46
    %v50 = vor.u32 %v48, %v49
    %v51 = vshll.u32 2475754826, %v45
    %v52 = vshrl.u32 2131351028, %v46
    %v53 = vor.u32 %v51, %v52
    %v54 = vshll.u32 2131351028, %v45
    %v55 = vshrl.u32 2102212464, %v46
    %v56 = vor.u32 %v54, %v55
    %v57 = vshll.u32 2102212464, %v45
    %v58 = vshrl.u32 920167782, %v46
    %v59 = vor.u32 %v57, %v58
    %v60 = vshll.u32 920167782, %v45
    %v61 = vshrl.u32 1326507024, %v46
    %v62 = vor.u32 %v60, %v61
    %vm63 = vcmp.lt.s32.totalorder %v44, 1
    %vm64 = vcmp.lt.s32.totalorder %v44, 2
    %vm65 = vcmp.lt.s32.totalorder %v44, 3
    %vm66 = vcmp.lt.s32.totalorder %v44, 4
    %v67 = vsel %vm63, %v47, %v50
    %v68 = vsel %vm66, %v56, 2102212464
    %v69 = vsel %vm65, %v53, %v68
    %v70 = vsel %vm64, %v67, %v69
    %v71 = vsel %vm63, %v50, %v53
    %v72 = vsel %vm66, %v59, 920167782
    %v73 = vsel %vm65, %v56, %v72
    %v74 = vsel %vm64, %v71, %v73
    %v75 = vsel %vm63, %v53, %v56
    %v76 = vsel %vm66, %v62, 1326507024
    %v77 = vsel %vm65, %v59, %v76
    %v78 = vsel %vm64, %v75, %v77
    %v79 = vshll.u32 %v39, 8
    %v80 = vmul.u32.u64.compose %v79, %v78
    %v81 = vextract.low.u32 %v80
    %v82 = vextract.high.u32 %v80
    %v83 = vmul.u32.u64.compose %v79, %v74
    %v84 = vextract.low.u32 %v83
    %v85 = vextract.high.u32 %v83
    %v86 = vmul.u32 %v79, %v70
    %v87 = vadd.s32 %v82, %v84
    %vm88 = vc.u32 %v82, %v84
    %v89 = vadd.s32 %v85, 1
    %v90 = vsel %vm88, %v89, %v85
    %v91 = vadd.s32 %v86, %v90
    %v92 = vadd.s32 %v91, 536870912
    %v93 = vshrl.u32 %v92, 30
    %v94 = vshll.u32 %v93, 30
    %v95 = vsub.s32 %v91, %v94
    %vm96 = vcmp.lt.s32.totalorder %v95, 0
    %v97 = vsub.s32 0, %v95
    %v98 = vsel %vm96, %v97, %v95
    %v99 = vclz %v98
    %v100 = vsub.s32 %v99, 2
    %vm101 = vcmp.gt.s32.totalorder 0, %v100
    %v102 = vsel %vm101, 0, %v100
    %v103 = vsub.s32 32, %v102
    %v104 = vshll.u32 %v95, %v102
    %v105 = vshrl.u32 %v87, %v103
    %v106 = vor.u32 %v104, %v105
    %v107 = vsub.s32 4294967266, %v102
    %v108 = vadd.s32 %v107, 127
    %v109 = vshll.u32 %v108, 23
    %v110 = vor.u32 4788187, %v109
    %v111 = vand.u32 2147483647, %v110
    %v113 = vcvt.s32.f32 %v106
    %v114 = vmul.f32 %v113, %v111
    %v115 = vxor.u32 %v114, 2147483648
    %v116 = vsel %vm33, %v115, %v114
    %v117 = vsub.s32 4, %v93
    %v118 = vsel %vm33, %v117, %v93
    %v119 = vsel %vm32, %v30, %v116
    %v120 = vsel %vm32, 0, %v118
    %v121 = vcosq.f32.pop %v119
    %v122 = vsinq.f32.pop %v119
    %vm123 = vweird.f32 %v30
    %v124 = vand.u32 %v120, 3
    %vm125 = vcmp.lt.s32.totalorder %v124, 2
    %vm126 = vcmp.eq.s32.totalorder %v124, 0
    %v127 = vxor.u32 %v122, 2147483648
    %v128 = vsel %vm126, %v121, %v127
    %vm129 = vcmp.eq.s32.totalorder %v124, 2
    %v130 = vxor.u32 %v121, 2147483648
    %v131 = vsel %vm129, %v130, %v122
    %v132 = vsel %vm125, %v128, %v131
    %v133 = vsel %vm123, nan, %v132
    %v134 = vand.u32 2147483647, %v30
    %vm135 = vcmp.le.f32.partialorder %v134, 0.7853982
    %vm136 = vcmp.lt.s32.totalorder %v30, 0
    %v137 = vand.u32 %v30, 2139095040
    %v138 = vshrl.u32 %v137, 23
    %v139 = vsub.s32 %v138, 127
    %v140 = vand.u32 2147483647, %v30
    %v141 = vand.u32 %v140, 8388607
    %v142 = vor.u32 %v141, 8388608
    %v143 = vsub.s32 0, %v142
    %v144 = vadd.s32 %v139, 1
    %vm145 = vcmp.gt.s32.totalorder %v144, 0
    %v146 = vsel %vm145, %v144, 0
    %v147 = vshrl.u32 %v146, 5
    %v148 = vand.u32 %v146, 31
    %v149 = vsub.s32 32, %v148
    %v150 = vshrl.u32 683565275, %v149
    %v151 = vshll.u32 683565275, %v148
    %v152 = vshrl.u32 2475754826, %v149
    %v153 = vor.u32 %v151, %v152
    %v154 = vshll.u32 2475754826, %v148
    %v155 = vshrl.u32 2131351028, %v149
    %v156 = vor.u32 %v154, %v155
    %v157 = vshll.u32 2131351028, %v148
    %v158 = vshrl.u32 2102212464, %v149
    %v159 = vor.u32 %v157, %v158
    %v160 = vshll.u32 2102212464, %v148
    %v161 = vshrl.u32 920167782, %v149
    %v162 = vor.u32 %v160, %v161
    %v163 = vshll.u32 920167782, %v148
    %v164 = vshrl.u32 1326507024, %v149
    %v165 = vor.u32 %v163, %v164
    %vm166 = vcmp.lt.s32.totalorder %v147, 1
    %vm167 = vcmp.lt.s32.totalorder %v147, 2
    %vm168 = vcmp.lt.s32.totalorder %v147, 3
    %vm169 = vcmp.lt.s32.totalorder %v147, 4
    %v170 = vsel %vm166, %v150, %v153
    %v171 = vsel %vm169, %v159, 2102212464
    %v172 = vsel %vm168, %v156, %v171
    %v173 = vsel %vm167, %v170, %v172
    %v174 = vsel %vm166, %v153, %v156
    %v175 = vsel %vm169, %v162, 920167782
    %v176 = vsel %vm168, %v159, %v175
    %v177 = vsel %vm167, %v174, %v176
    %v178 = vsel %vm166, %v156, %v159
    %v179 = vsel %vm169, %v165, 1326507024
    %v180 = vsel %vm168, %v162, %v179
    %v181 = vsel %vm167, %v178, %v180
    %v182 = vshll.u32 %v142, 8
    %v183 = vmul.u32.u64.compose %v182, %v181
    %v184 = vextract.low.u32 %v183
    %v185 = vextract.high.u32 %v183
    %v186 = vmul.u32.u64.compose %v182, %v177
    %v187 = vextract.low.u32 %v186
    %v188 = vextract.high.u32 %v186
    %v189 = vmul.u32 %v182, %v173
    %v190 = vadd.s32 %v185, %v187
    %vm191 = vc.u32 %v185, %v187
    %v192 = vadd.s32 %v188, 1
    %v193 = vsel %vm191, %v192, %v188
    %v194 = vadd.s32 %v189, %v193
    %v195 = vadd.s32 %v194, 536870912
    %v196 = vshrl.u32 %v195, 30
    %v197 = vshll.u32 %v196, 30
    %v198 = vsub.s32 %v194, %v197
    %vm199 = vcmp.lt.s32.totalorder %v198, 0
    %v200 = vsub.s32 0, %v198
    %v201 = vsel %vm199, %v200, %v198
    %v202 = vclz %v201
    %v203 = vsub.s32 %v202, 2
    %vm204 = vcmp.gt.s32.totalorder 0, %v203
    %v205 = vsel %vm204, 0, %v203
    %v206 = vsub.s32 32, %v205
    %v207 = vshll.u32 %v198, %v205
    %v208 = vshrl.u32 %v190, %v206
    %v209 = vor.u32 %v207, %v208
    %v210 = vsub.s32 4294967266, %v205
    %v211 = vadd.s32 %v210, 127
    %v212 = vshll.u32 %v211, 23
    %v213 = vor.u32 4788187, %v212
    %v214 = vand.u32 2147483647, %v213
    %v216 = vcvt.s32.f32 %v209
    %v217 = vmul.f32 %v216, %v214
    %v218 = vxor.u32 %v217, 2147483648
    %v219 = vsel %vm136, %v218, %v217
    %v220 = vsub.s32 4, %v196
    %v221 = vsel %vm136, %v220, %v196
    %v222 = vsel %vm135, %v30, %v219
    %v223 = vsel %vm135, 0, %v221
    %v224 = vcosq.f32.pop %v222
    %v225 = vsinq.f32.pop %v222
    %vm226 = vweird.f32 %v30
    %v227 = vadd.s32 %v223, 3
    %v228 = vand.u32 %v227, 3
    %vm229 = vcmp.lt.s32.totalorder %v228, 2
    %vm230 = vcmp.eq.s32.totalorder %v228, 0
    %v231 = vxor.u32 %v225, 2147483648
    %v232 = vsel %vm230, %v224, %v231
    %vm233 = vcmp.eq.s32.totalorder %v228, 2
    %v234 = vxor.u32 %v224, 2147483648
    %v235 = vsel %vm233, %v234, %v225
    %v236 = vsel %vm229, %v232, %v235
    %v237 = vsel %vm226, nan, %v236
    %v238 = vlaneseq
    %v239 = vand.u32 %v238, 127
    %v240 = vshra.s32 %v239, 3
    %v241 = vand.u32 %v240, 1
    %vm242 = vcmp.eq.s32.totalorder %v241, 1
    %v243 = vsel %vm242, 1, 0
    %vm244 = vcmp.eq.s32.totalorder %v243, 1
    %246 = vset.pattern.permute.xlu0 0
    %247 = vperm.xlu0 %246, %v237
    %v248 = vpop.permute.xlu0 %247
    %251 = vset.pattern.permute.xlu0 0
    %252 = vperm.xlu0 %251, %v133
    %v253 = vpop.permute.xlu0 %252
    %v255 = vsel %vm244, %v248, %v253
    %v256 = vshra.s32 %v239, 2
    %v257 = vand.u32 %v256, 1
    %vm258 = vcmp.eq.s32.totalorder %v257, 1
    %v259 = vsel %vm258, 1, 0
    %vm260 = vcmp.eq.s32.totalorder %v259, 1
    %261 = vset.pattern.permute.xlu0 1
    %262 = vperm.xlu0 %261, %v237
    %v263 = vpop.permute.xlu0 %262
    %265 = vset.pattern.permute.xlu0 1
    %266 = vperm.xlu0 %265, %v133
    %v267 = vpop.permute.xlu0 %266
    %v269 = vsel %vm260, %v263, %v267
    %v270 = vmul.f32 %v255, %v269
    %v271 = vshra.s32 %v239, 1
    %v272 = vand.u32 %v271, 1
    %vm273 = vcmp.eq.s32.totalorder %v272, 1
    %v274 = vsel %vm273, 1, 0
    %vm275 = vcmp.eq.s32.totalorder %v274, 1
    %276 = vset.pattern.permute.xlu0 2
    %277 = vperm.xlu0 %276, %v237
    %v278 = vpop.permute.xlu0 %277
    %280 = vset.pattern.permute.xlu0 2
    %281 = vperm.xlu0 %280, %v133
    %v282 = vpop.permute.xlu0 %281
    %v284 = vsel %vm275, %v278, %v282
    %v285 = vmul.f32 %v270, %v284
    %v286 = vand.u32 %v239, 1
    %vm287 = vcmp.eq.s32.totalorder %v286, 1
    %v288 = vsel %vm287, 1, 0
    %vm289 = vcmp.eq.s32.totalorder %v288, 1
    %290 = vset.pattern.permute.xlu0 3
    %291 = vperm.xlu0 %290, %v237
    %v292 = vpop.permute.xlu0 %291
    %294 = vset.pattern.permute.xlu0 3
    %295 = vperm.xlu0 %294, %v133
    %v296 = vpop.permute.xlu0 %295
    %v298 = vsel %vm289, %v292, %v296
    %v299 = vmul.f32 %v285, %v298
    %v300 = vld [vmem:[#allocation2] sm:$0xff]
    %v301 = vld [vmem:[#allocation2 + $0x8] sm:$0xff]
    %vm302 = vcmask 130048
    %v304 = vsel %vm302, %v299, 0
    %306 = vmatprep.subr.mxu0 0.0
    %307 = vmatpush1.msra.mxu0 %v300
    %308 = vmatprep.subr.mxu0 0.0
    %309 = vmatpush1.msra.mxu0 %v301
    %310 = vmatprep.subr.mxu0 0.0
    %311 = vmatpush1.msra.mxu0 0.0
    %312 = vmatprep.subr.mxu0 0.0
    %313 = vmatpush1.msra.mxu0 0.0
    %314 = vmatprep.subr.mxu0 0.0
    %315 = vmatpush1.msra.mxu0 0.0
    %316 = vmatprep.subr.mxu0 0.0
    %317 = vmatpush1.msra.mxu0 0.0
    %318 = vmatprep.subr.mxu0 0.0
    %319 = vmatpush1.msra.mxu0 0.0
    %320 = vmatprep.subr.mxu0 0.0
    %321 = vmatpush1.msra.mxu0 0.0
    %322 = vmatprep.subr.mxu0 0.0
    %323 = vmatpush1.msra.mxu0 0.0
    %324 = vmatprep.subr.mxu0 0.0
    %325 = vmatpush1.msra.mxu0 0.0
    %326 = vmatprep.subr.mxu0 0.0
    %327 = vmatpush1.msra.mxu0 0.0
    %328 = vmatprep.subr.mxu0 0.0
    %329 = vmatpush1.msra.mxu0 0.0
    %330 = vmatprep.subr.mxu0 0.0
    %331 = vmatpush1.msra.mxu0 0.0
    %332 = vmatprep.subr.mxu0 0.0
    %333 = vmatpush1.msra.mxu0 0.0
    %334 = vmatprep.subr.mxu0 0.0
    %335 = vmatpush1.msra.mxu0 0.0
    %336 = vmatprep.subr.mxu0 0.0
    %337 = vmatpush1.msra.mxu0 0.0
    %338 = vmatprep.subr.mxu0 0.0
    %339 = vmatpush1.msra.mxu0 0.0
    %340 = vmatprep.subr.mxu0 0.0
    %341 = vmatpush1.msra.mxu0 0.0
    %342 = vmatprep.subr.mxu0 0.0
    %343 = vmatpush1.msra.mxu0 0.0
    %344 = vmatprep.subr.mxu0 0.0
    %345 = vmatpush1.msra.mxu0 0.0
    %346 = vmatprep.subr.mxu0 0.0
    %347 = vmatpush1.msra.mxu0 0.0
    %348 = vmatprep.subr.mxu0 0.0
    %349 = vmatpush1.msra.mxu0 0.0
    %350 = vmatprep.subr.mxu0 0.0
    %351 = vmatpush1.msra.mxu0 0.0
    %352 = vmatprep.subr.mxu0 0.0
    %353 = vmatpush1.msra.mxu0 0.0
    %354 = vmatprep.subr.mxu0 0.0
    %355 = vmatpush1.msra.mxu0 0.0
    %356 = vmatprep.subr.mxu0 0.0
    %357 = vmatpush1.msra.mxu0 0.0
    %358 = vmatprep.subr.mxu0 0.0
    %359 = vmatpush1.msra.mxu0 0.0
    %360 = vmatprep.subr.mxu0 0.0
    %361 = vmatpush1.msra.mxu0 0.0
    %362 = vmatprep.subr.mxu0 0.0
    %363 = vmatpush1.msra.mxu0 0.0
    %364 = vmatprep.subr.mxu0 0.0
    %365 = vmatpush1.msra.mxu0 0.0
    %366 = vmatprep.subr.mxu0 0.0
    %367 = vmatpush1.msra.mxu0 0.0
    %368 = vmatprep.subr.mxu0 0.0
    %369 = vmatpush1.msra.mxu0 0.0
    %370 = vmatprep.mubr.f32.mxu0 0.0
    %371 = vmatmul.mubr.f32.gmra.mrb[0].mxu0 %v304
    %v372 = vpop.f32.mrb[0].mxu0
    %v373 = vadd.f32 0.0, %v372
    %v374 = vpop.f32.mrb[0].mxu0
    %375 = vdwg.mxu0
    %v376 = vmul.f32 %v373, %v373
    %378 = vrot.lane.b32.xlu0 %v376, 112
    %v379 = vpop.permute.xlu0 %378
    %v381 = vadd.f32 %v376, %v379
    %v382 = vld [vmem:[%s2] sm:$0xff]
    %v383 = vld [vmem:[%s2 + $0x8] sm:$0xff]
    %v385 = vsel %vm302, %v381, 0
    %387 = vmatprep.subr.mxu0 0.0
    %388 = vmatpush1.msra.mxu0 %v382
    %389 = vmatprep.subr.mxu0 0.0
    %390 = vmatpush1.msra.mxu0 %v383
    %391 = vmatprep.subr.mxu0 0.0
    %392 = vmatpush1.msra.mxu0 0.0
    %393 = vmatprep.subr.mxu0 0.0
    %394 = vmatpush1.msra.mxu0 0.0
    %395 = vmatprep.subr.mxu0 0.0
    %396 = vmatpush1.msra.mxu0 0.0
    %397 = vmatprep.subr.mxu0 0.0
    %398 = vmatpush1.msra.mxu0 0.0
    %399 = vmatprep.subr.mxu0 0.0
    %400 = vmatpush1.msra.mxu0 0.0
    %401 = vmatprep.subr.mxu0 0.0
    %402 = vmatpush1.msra.mxu0 0.0
    %403 = vmatprep.subr.mxu0 0.0
    %404 = vmatpush1.msra.mxu0 0.0
    %405 = vmatprep.subr.mxu0 0.0
    %406 = vmatpush1.msra.mxu0 0.0
    %407 = vmatprep.subr.mxu0 0.0
    %408 = vmatpush1.msra.mxu0 0.0
    %409 = vmatprep.subr.mxu0 0.0
    %410 = vmatpush1.msra.mxu0 0.0
    %411 = vmatprep.subr.mxu0 0.0
    %412 = vmatpush1.msra.mxu0 0.0
    %413 = vmatprep.subr.mxu0 0.0
    %414 = vmatpush1.msra.mxu0 0.0
    %415 = vmatprep.subr.mxu0 0.0
    %416 = vmatpush1.msra.mxu0 0.0
    %417 = vmatprep.subr.mxu0 0.0
    %418 = vmatpush1.msra.mxu0 0.0
    %419 = vmatprep.subr.mxu0 0.0
    %420 = vmatpush1.msra.mxu0 0.0
    %421 = vmatprep.subr.mxu0 0.0
    %422 = vmatpush1.msra.mxu0 0.0
    %423 = vmatprep.subr.mxu0 0.0
    %424 = vmatpush1.msra.mxu0 0.0
    %425 = vmatprep.subr.mxu0 0.0
    %426 = vmatpush1.msra.mxu0 0.0
    %427 = vmatprep.subr.mxu0 0.0
    %428 = vmatpush1.msra.mxu0 0.0
    %429 = vmatprep.subr.mxu0 0.0
    %430 = vmatpush1.msra.mxu0 0.0
    %431 = vmatprep.subr.mxu0 0.0
    %432 = vmatpush1.msra.mxu0 0.0
    %433 = vmatprep.subr.mxu0 0.0
    %434 = vmatpush1.msra.mxu0 0.0
    %435 = vmatprep.subr.mxu0 0.0
    %436 = vmatpush1.msra.mxu0 0.0
    %437 = vmatprep.subr.mxu0 0.0
    %438 = vmatpush1.msra.mxu0 0.0
    %439 = vmatprep.subr.mxu0 0.0
    %440 = vmatpush1.msra.mxu0 0.0
    %441 = vmatprep.subr.mxu0 0.0
    %442 = vmatpush1.msra.mxu0 0.0
    %443 = vmatprep.subr.mxu0 0.0
    %444 = vmatpush1.msra.mxu0 0.0
    %445 = vmatprep.subr.mxu0 0.0
    %446 = vmatpush1.msra.mxu0 0.0
    %447 = vmatprep.subr.mxu0 0.0
    %448 = vmatpush1.msra.mxu0 0.0
    %449 = vmatprep.subr.mxu0 0.0
    %450 = vmatpush1.msra.mxu0 0.0
    %451 = vmatprep.mubr.f32.mxu0 0.0
    %452 = vmatmul.mubr.f32.gmra.mrb[0].mxu0 %v385
    %v453 = vpop.f32.mrb[0].mxu0
    %v454 = vadd.f32 0.0, %v453
    %v455 = vpop.f32.mrb[0].mxu0
    %456 = vdwg.mxu0
    %457 = vmax.xlane.f32.xlu0 %v454
    %v458 = vpop.xlane.xlu0 %457
    %v459 = vsub.f32 %v454, %v458
    %v460 = vmul.f32 %v459, 1.442695
    %v461 = vpow.pop %v460
    %462 = vadd.xlane.f32.xlu0 %v461
    %v463 = vpop.xlane.xlu0 %462
    %v464 = vrcp.pop %v463
    %v465 = vmul.f32 %v463, %v464
    %v466 = vsub.f32 2.0, %v465
    %v467 = vmul.f32 %v464, %v466
    %v468 = vmul.f32 %v461, %v467
    %469 = vst [vmem:[#allocation5] sm:$0xff] %v468
    // Predicated region
    $region18: #{tpu_custom_call.1} parent=1 // pred_check
      _
    $region19: #{tpu_custom_call.1} parent=1 // pred_check_branch
      %471 = sbr.rel (0) target = $region21
    $region20: #{tpu_custom_call.1} parent=1 // pred_region
      %s473 = ssub.s32 128, 128
      %474 = vsyncadd [#allocation4], %s473
      %s476 = sshll.u32 [#allocation5], 4
      %s477 = int_to_ptr.vmem [resolvable:$true] %s476
      %479 = dma.vmem_to_hbm [thread:$0]  %s477, 128, %s3, [#allocation4]
    $region21: #{tpu_custom_call.1} parent=1 // pred_fallthru
      _
    // Predicated region
    $region22: #{tpu_custom_call.1} parent=1 // pred_check
      _
    $region23: #{tpu_custom_call.1} parent=1 // pred_check_branch
      %481 = sbr.rel (0) target = $region25
    $region24: #{tpu_custom_call.1} parent=1 // pred_region
      %482 = dma.done [#allocation4], 128
    $region25: #{tpu_custom_call.1} parent=1 // pred_fallthru
      _
    %483 = vsyncpa [#allocation3], 1
    %484 = vsyncpa [#allocation4], 1

</llo_original>
